<compile_context>
chip_gen: v7x
topology: tpu7x:2x2x1
jax: 0.10.0
libtpu: 0.0.40
codegen_flags: <defaults>
</compile_context>

<pallas_src>
import functools

import jax
import jax.numpy as jnp
from jax.experimental import pallas as pl
from jax.experimental.pallas import tpu as pltpu


def _conv_lrelu_kernel(w_ref, p_ref, o_ref, *, negative_slope):
    # w_ref: (Cout, K)            K = Cin*KH*KW, row order (ci, kh, kw)
    # p_ref: (K, N*HoWo_pad)      lane axis = flattened batch*spatial (padded to 128k)
    # o_ref: (Cout, N*HoWo_pad)
    acc = jnp.dot(w_ref[...], p_ref[...], preferred_element_type=jnp.float32)
    y = jnp.maximum(acc, negative_slope * acc)          # fused LeakyReLU
    o_ref[...] = y.astype(o_ref.dtype)                  # lane-dense, unmasked vst


def basic_conv2d(x_nchw, weight_oihw, *, negative_slope=0.01):
    """Conv2d(bias=False, stride=1, padding=0) + leaky_relu, Pallas on TPU.

    x_nchw:      (N, C_in, H, W)        -- PyTorch layout
    weight_oihw: (C_out, C_in, KH, KW)  -- PyTorch layout
    returns:     (N, C_out, H_out, W_out)
    """
    n, c_in, h, w = x_nchw.shape
    c_out, c_in_w, kh, kw = weight_oihw.shape
    assert c_in == c_in_w
    h_out, w_out = h - kh + 1, w - kw + 1
    hw_out = h_out * w_out
    k_dim = c_in * kh * kw

    # Pad each image's flattened spatial extent to a multiple of 128 lanes.
    hw_pad = ((hw_out + 127) // 128) * 128
    n_cols = n * hw_pad

    # ---- wrapper-side im2col (tiny, off the hot path) -----------------------
    # (N, Cin, H, W) -> (N, K, Ho, Wo) with K ordered (ci, kh, kw).
    patches = jax.lax.conv_general_dilated_patches(
        x_nchw, (kh, kw), (1, 1), "VALID",
        dimension_numbers=("NCHW", "OIHW", "NCHW"))
    patches = patches.reshape(n, k_dim, hw_out)
    patches = jnp.transpose(patches, (1, 0, 2))                       # (K, N, HoWo)
    patches = jnp.pad(patches, ((0, 0), (0, 0), (0, hw_pad - hw_out)))
    patches = patches.reshape(k_dim, n_cols)                          # (K, N*hw_pad)

    # Weight (Cout, Cin, KH, KW) -> (Cout, K); OIHW flattening is already
    # (ci, kh, kw) order, matching the patches rows -> no transpose needed.
    w_mat = weight_oihw.reshape(c_out, k_dim)

    kernel = functools.partial(_conv_lrelu_kernel,
                               negative_slope=negative_slope)

    out = pl.pallas_call(
        kernel,
        out_shape=jax.ShapeDtypeStruct((c_out, n_cols), x_nchw.dtype),
        grid=(1,),  # whole problem in one step; per-call overhead paid once
        in_specs=[
            pl.BlockSpec((c_out, k_dim), lambda i: (0, 0)),
            pl.BlockSpec((k_dim, n_cols), lambda i: (0, 0)),
        ],
        out_specs=pl.BlockSpec((c_out, n_cols), lambda i: (0, 0)),
        compiler_params=pltpu.CompilerParams(
            dimension_semantics=("arbitrary",)),
    )(w_mat, patches)

    # Strip lane padding and restore (N, Cout, Ho, Wo); this is a tiny
    # (Cout, N, HoWo) slice + transpose, not a full activation relayout.
    out = out.reshape(c_out, n, hw_pad)[:, :, :hw_out]
    out = jnp.transpose(out, (1, 0, 2)).reshape(n, c_out, h_out, w_out)
    return out


if __name__ == "__main__":
    key = jax.random.PRNGKey(0)
    k_x, k_w = jax.random.split(key)

    # small shapes consistent with the module: N=2, C_in=4, H=W=16, C_out=8, k=3
    n, c_in, h, w = 2, 4, 16, 16
    c_out, ksz = 8, 3

    x = jax.random.normal(k_x, (n, c_in, h, w), dtype=jnp.float32)
    # deterministic synthetic weight (PyTorch OIHW shape), no checkpoint load
    fan_in = c_in * ksz * ksz
    bound = (1.0 / fan_in) ** 0.5
    weight = jax.random.uniform(k_w, (c_out, c_in, ksz, ksz),
                                minval=-bound, maxval=bound, dtype=jnp.float32)

    out = basic_conv2d(x, weight)
    out = jax.block_until_ready(out)

    # sanity check against XLA's conv + leaky_relu reference
    ref = jax.lax.conv_general_dilated(
        x, weight, window_strides=(1, 1), padding="VALID",
        dimension_numbers=("NCHW", "OIHW", "NCHW"))
    ref = jnp.where(ref > 0, ref, 0.01 * ref)
    assert out.shape == (n, c_out, h - ksz + 1, w - ksz + 1)
    assert jnp.allclose(out, ref, atol=1e-5, rtol=1e-5)

    print("KERNEL_OK")
</pallas_src>

<mosaic_0001>
module attributes {stable_mosaic.version = 11 : i64} {
  func.func @_conv_lrelu_kernel(%arg0: i32, %arg1: memref<8x36xf32, #tpu.memory_space<vmem>>, %arg2: memref<36x512xf32, #tpu.memory_space<vmem>>, %arg3: memref<8x512xf32, #tpu.memory_space<vmem>>) attributes {dimension_semantics = [#tpu.dimension_semantics<arbitrary>], iteration_bounds = array<i64: 1>, scalar_prefetch = 0 : i64, scratch_operands = 0 : i64, tpu.core_type = #tpu.core_type<tc>, window_params = [{pipeline_mode = #tpu.pipeline_mode<synchronous>, transform_indices = @transform_0, window_bounds = array<i64: 8, 36>}, {pipeline_mode = #tpu.pipeline_mode<synchronous>, transform_indices = @transform_1, window_bounds = array<i64: 36, 512>}, {pipeline_mode = #tpu.pipeline_mode<synchronous>, transform_indices = @transform_2, window_bounds = array<i64: 8, 512>}]} {
    %c0 = arith.constant 0 : index
    %c0_0 = arith.constant 0 : index
    %0 = vector.load %arg1[%c0, %c0_0] : memref<8x36xf32, #tpu.memory_space<vmem>>, vector<8x36xf32>
    %c0_1 = arith.constant 0 : index
    %c0_2 = arith.constant 0 : index
    %1 = vector.load %arg2[%c0_1, %c0_2] : memref<36x512xf32, #tpu.memory_space<vmem>>, vector<36x512xf32>
    %cst = arith.constant dense<0.000000e+00> : vector<8x512xf32>
    %2 = tpu.matmul %0, %1, %cst {dimension_numbers = #tpu.dot_dimension_numbers<[1], [0], [0], [1], [0, 0, 1, 1], [], []>} : vector<8x36xf32>, vector<36x512xf32>, vector<8x512xf32> -> vector<8x512xf32>
    %cst_3 = arith.constant 0.00999999977 : f32
    %3 = vector.broadcast %cst_3 : f32 to vector<8x512xf32>
    %4 = arith.mulf %3, %2 : vector<8x512xf32>
    %5 = arith.maximumf %2, %4 : vector<8x512xf32>
    %c0_4 = arith.constant 0 : index
    %c0_5 = arith.constant 0 : index
    %6 = vector.load %arg3[%c0_4, %c0_5] : memref<8x512xf32, #tpu.memory_space<vmem>>, vector<8x512xf32>
    tpu.vector_store %arg3[%c0_4, %c0_5], %5 {strides = array<i32>} : memref<8x512xf32, #tpu.memory_space<vmem>>, vector<8x512xf32>,
    return
  }
  func.func @transform_0(%arg0: i32) -> (i32, i32) {
    %c0_i32 = arith.constant 0 : i32
    %c0_i32_0 = arith.constant 0 : i32
    %c0_i32_1 = arith.constant 0 : i32
    return %c0_i32, %c0_i32_0 : i32, i32
  }
  func.func @transform_1(%arg0: i32) -> (i32, i32) {
    %c0_i32 = arith.constant 0 : i32
    %c0_i32_0 = arith.constant 0 : i32
    %c0_i32_1 = arith.constant 0 : i32
    return %c0_i32, %c0_i32_0 : i32, i32
  }
  func.func @transform_2(%arg0: i32) -> (i32, i32) {
    %c0_i32 = arith.constant 0 : i32
    %c0_i32_0 = arith.constant 0 : i32
    %c0_i32_1 = arith.constant 0 : i32
    return %c0_i32, %c0_i32_0 : i32, i32
  }
}

</mosaic_0001>

<llo_original>
// kernel: tpu_custom_call.1
$region0: #{tpu_custom_call.1}
  #allocation0 [shape = 'u32[]', space=smem, size = 0x4, offset = 0x4, fixed_abs, tag = 'smem constant byte address 0x4 - core index']
  #allocation1 [shape = 'u32[144,128]{1,0:T(1,128)}', space=vmem, size = 0x12000, scoped, tag = 'internal scratch']
  %s0 = inlined_call_operand.hbm [shape: f32[8,36], index: 0, kind: input, shape index: {}]
  %s1 = inlined_call_operand.hbm [shape: f32[36,512], index: 1, kind: input, shape index: {}]
  %s2 = inlined_call_operand.hbm [shape: f32[8,512], index: 2, kind: output, shape index: {}]
  %s3 = sld [smem:[#allocation0]]
  $region26: #{tpu_custom_call.1} parent=0
    _
  %s5 = ssub.s32 1, %s3
  %s6 = scalar_select 0, %s5, %s3
  $region1: #{tpu_custom_call.1} parent=0
    #allocation2 [shape = 'u8[4096]{0}', space=vmem, size = 0x1000, scoped, tag = 'input window, operand 0, single buffered']
    #allocation3 [shape = 's32[1]{0}', space=sflag, size = 0x4, scoped, tag = 'scoped memory for tpu_custom_call.1']
    #allocation4 [shape = 's32[1]{0}', space=sflag, size = 0x4, scoped, tag = 'scoped memory for tpu_custom_call.1']
    #allocation5 [shape = 'u8[81920]{0}', space=vmem, size = 0x14000, scoped, tag = 'input window, operand 1, single buffered']
    #allocation6 [shape = 's32[1]{0}', space=sflag, size = 0x4, scoped, tag = 'scoped memory for tpu_custom_call.1']
    #allocation7 [shape = 'u8[16384]{0}', space=vmem, size = 0x4000, scoped, tag = 'output window, operand 0, single buffered']
    %7 = vsyncpa [#allocation3], 0
    %8 = vsyncpa [#allocation6], 0
    %9 = vsyncpa [#allocation4], 0
    // Predicated region
    $region2: #{tpu_custom_call.1} parent=1 // pred_check
      _
    $region3: #{tpu_custom_call.1} parent=1 // pred_check_branch
      %11 = sbr.rel (0) target = $region5
    $region4: #{tpu_custom_call.1} parent=1 // pred_region
      %s13 = ssub.s32 128, 128
      %14 = vsyncadd [#allocation3], %s13
      %s16 = sshll.u32 [#allocation2], 4
      %s17 = int_to_ptr.vmem [resolvable:$true] %s16
      %19 = dma.hbm_to_vmem [thread:$0]  %s0, 128, %s17, [#allocation3]
    $region5: #{tpu_custom_call.1} parent=1 // pred_fallthru
      _
    // Predicated region
    $region6: #{tpu_custom_call.1} parent=1 // pred_check
      _
    $region7: #{tpu_custom_call.1} parent=1 // pred_check_branch
      %21 = sbr.rel (0) target = $region9
    $region8: #{tpu_custom_call.1} parent=1 // pred_region
      %s23 = ssub.s32 2560, 2560
      %24 = vsyncadd [#allocation6], %s23
      %s25 = sshll.u32 [#allocation5], 4
      %s26 = int_to_ptr.vmem [resolvable:$true] %s25
      %31 = dma.hbm_to_vmem [thread:$0]  %s1, 2560, %s26, [#allocation6], 512, 512, 32
    $region9: #{tpu_custom_call.1} parent=1 // pred_fallthru
      _
    // Predicated region
    $region10: #{tpu_custom_call.1} parent=1 // pred_check
      _
    $region11: #{tpu_custom_call.1} parent=1 // pred_check_branch
      %33 = sbr.rel (0) target = $region13
    $region12: #{tpu_custom_call.1} parent=1 // pred_region
      %34 = dma.done [#allocation3], 128
    $region13: #{tpu_custom_call.1} parent=1 // pred_fallthru
      _
    // Predicated region
    $region14: #{tpu_custom_call.1} parent=1 // pred_check
      _
    $region15: #{tpu_custom_call.1} parent=1 // pred_check_branch
      %36 = sbr.rel (0) target = $region17
    $region16: #{tpu_custom_call.1} parent=1 // pred_region
      %37 = dma.done [#allocation6], 2560
    $region17: #{tpu_custom_call.1} parent=1 // pred_fallthru
      _
    %v38 = vld [vmem:[#allocation2] sm:$0xff]
    %v39 = vld [vmem:[#allocation5] sm:$0xff]
    %v40 = vld [vmem:[#allocation5 + $0x8] sm:$0xff]
    %v41 = vld [vmem:[#allocation5 + $0x10] sm:$0xff]
    %v42 = vld [vmem:[#allocation5 + $0x18] sm:$0xff]
    %v43 = vld [vmem:[#allocation5 + $0x20] sm:$0xff]
    %v44 = vld [vmem:[#allocation5 + $0x28] sm:$0xff]
    %v45 = vld [vmem:[#allocation5 + $0x30] sm:$0xff]
    %v46 = vld [vmem:[#allocation5 + $0x38] sm:$0xff]
    %v47 = vld [vmem:[#allocation5 + $0x40] sm:$0xff]
    %v48 = vld [vmem:[#allocation5 + $0x48] sm:$0xff]
    %v49 = vld [vmem:[#allocation5 + $0x50] sm:$0xff]
    %v50 = vld [vmem:[#allocation5 + $0x58] sm:$0xff]
    %v51 = vld [vmem:[#allocation5 + $0x60] sm:$0xff]
    %v52 = vld [vmem:[#allocation5 + $0x68] sm:$0xff]
    %v53 = vld [vmem:[#allocation5 + $0x70] sm:$0xff]
    %v54 = vld [vmem:[#allocation5 + $0x78] sm:$0xff]
    %v55 = vld [vmem:[#allocation5 + $0x80] sm:$0xf]
    %v56 = vld [vmem:[#allocation5 + $0x88] sm:$0xf]
    %v57 = vld [vmem:[#allocation5 + $0x90] sm:$0xf]
    %v58 = vld [vmem:[#allocation5 + $0x98] sm:$0xf]
    %vm59 = vcmask 293888
    %v61 = vsel %vm59, %v38, 0
    %vm63 = vcmask 1043456
    %v65 = vsel %vm63, %v55, 0
    %v68 = vsel %vm63, %v56, 0
    %v71 = vsel %vm63, %v57, 0
    %v74 = vsel %vm63, %v58, 0
    %76 = vmatprep.subr.mxu0 %v40
    %77 = vmatpush1.msra.mxu0 %v39
    %78 = vmatprep.subr.mxu0 %v44
    %79 = vmatpush1.msra.mxu0 %v43
    %80 = vmatprep.subr.mxu0 %v48
    %81 = vmatpush1.msra.mxu0 %v47
    %82 = vmatprep.subr.mxu0 %v52
    %83 = vmatpush1.msra.mxu0 %v51
    %84 = vmatprep.subr.mxu0 %v68
    %85 = vmatpush1.msra.mxu0 %v65
    %86 = vmatprep.subr.mxu0 0.0
    %87 = vmatpush1.msra.mxu0 0.0
    %88 = vmatprep.subr.mxu0 0.0
    %89 = vmatpush1.msra.mxu0 0.0
    %90 = vmatprep.subr.mxu0 0.0
    %91 = vmatpush1.msra.mxu0 0.0
    %92 = vmatprep.subr.mxu0 0.0
    %93 = vmatpush1.msra.mxu0 0.0
    %94 = vmatprep.subr.mxu0 0.0
    %95 = vmatpush1.msra.mxu0 0.0
    %96 = vmatprep.subr.mxu0 0.0
    %97 = vmatpush1.msra.mxu0 0.0
    %98 = vmatprep.subr.mxu0 0.0
    %99 = vmatpush1.msra.mxu0 0.0
    %100 = vmatprep.subr.mxu0 0.0
    %101 = vmatpush1.msra.mxu0 0.0
    %102 = vmatprep.subr.mxu0 0.0
    %103 = vmatpush1.msra.mxu0 0.0
    %104 = vmatprep.subr.mxu0 0.0
    %105 = vmatpush1.msra.mxu0 0.0
    %106 = vmatprep.subr.mxu0 0.0
    %107 = vmatpush1.msra.mxu0 0.0
    %108 = vmatprep.subr.mxu0 0.0
    %109 = vmatpush1.msra.mxu0 0.0
    %110 = vmatprep.subr.mxu0 0.0
    %111 = vmatpush1.msra.mxu0 0.0
    %112 = vmatprep.subr.mxu0 0.0
    %113 = vmatpush1.msra.mxu0 0.0
    %114 = vmatprep.subr.mxu0 0.0
    %115 = vmatpush1.msra.mxu0 0.0
    %116 = vmatprep.subr.mxu0 0.0
    %117 = vmatpush1.msra.mxu0 0.0
    %118 = vmatprep.subr.mxu0 0.0
    %119 = vmatpush1.msra.mxu0 0.0
    %120 = vmatprep.subr.mxu0 0.0
    %121 = vmatpush1.msra.mxu0 0.0
    %122 = vmatprep.subr.mxu0 0.0
    %123 = vmatpush1.msra.mxu0 0.0
    %124 = vmatprep.subr.mxu0 0.0
    %125 = vmatpush1.msra.mxu0 0.0
    %126 = vmatprep.subr.mxu0 0.0
    %127 = vmatpush1.msra.mxu0 0.0
    %128 = vmatprep.subr.mxu0 0.0
    %129 = vmatpush1.msra.mxu0 0.0
    %130 = vmatprep.subr.mxu0 0.0
    %131 = vmatpush1.msra.mxu0 0.0
    %132 = vmatprep.subr.mxu0 0.0
    %133 = vmatpush1.msra.mxu0 0.0
    %134 = vmatprep.subr.mxu0 0.0
    %135 = vmatpush1.msra.mxu0 0.0
    %136 = vmatprep.subr.mxu0 0.0
    %137 = vmatpush1.msra.mxu0 0.0
    %138 = vmatprep.subr.mxu0 0.0
    %139 = vmatpush1.msra.mxu0 0.0
    %140 = vmatprep.mubr.f32.mxu0 0.0
    %141 = vmatmul.mubr.f32.gmra.mrb[0].mxu0 %v61
    %v142 = vpop.f32.mrb[0].mxu0
    %v143 = vadd.f32 0.0, %v142
    %v144 = vpop.f32.mrb[0].mxu0
    %v145 = vadd.f32 0.0, %v144
    %146 = vdwg.mxu0
    %147 = vmatprep.subr.mxu0 %v42
    %148 = vmatpush1.msra.mxu0 %v41
    %149 = vmatprep.subr.mxu0 %v46
    %150 = vmatpush1.msra.mxu0 %v45
    %151 = vmatprep.subr.mxu0 %v50
    %152 = vmatpush1.msra.mxu0 %v49
    %153 = vmatprep.subr.mxu0 %v54
    %154 = vmatpush1.msra.mxu0 %v53
    %155 = vmatprep.subr.mxu0 %v74
    %156 = vmatpush1.msra.mxu0 %v71
    %157 = vmatprep.subr.mxu0 0.0
    %158 = vmatpush1.msra.mxu0 0.0
    %159 = vmatprep.subr.mxu0 0.0
    %160 = vmatpush1.msra.mxu0 0.0
    %161 = vmatprep.subr.mxu0 0.0
    %162 = vmatpush1.msra.mxu0 0.0
    %163 = vmatprep.subr.mxu0 0.0
    %164 = vmatpush1.msra.mxu0 0.0
    %165 = vmatprep.subr.mxu0 0.0
    %166 = vmatpush1.msra.mxu0 0.0
    %167 = vmatprep.subr.mxu0 0.0
    %168 = vmatpush1.msra.mxu0 0.0
    %169 = vmatprep.subr.mxu0 0.0
    %170 = vmatpush1.msra.mxu0 0.0
    %171 = vmatprep.subr.mxu0 0.0
    %172 = vmatpush1.msra.mxu0 0.0
    %173 = vmatprep.subr.mxu0 0.0
    %174 = vmatpush1.msra.mxu0 0.0
    %175 = vmatprep.subr.mxu0 0.0
    %176 = vmatpush1.msra.mxu0 0.0
    %177 = vmatprep.subr.mxu0 0.0
    %178 = vmatpush1.msra.mxu0 0.0
    %179 = vmatprep.subr.mxu0 0.0
    %180 = vmatpush1.msra.mxu0 0.0
    %181 = vmatprep.subr.mxu0 0.0
    %182 = vmatpush1.msra.mxu0 0.0
    %183 = vmatprep.subr.mxu0 0.0
    %184 = vmatpush1.msra.mxu0 0.0
    %185 = vmatprep.subr.mxu0 0.0
    %186 = vmatpush1.msra.mxu0 0.0
    %187 = vmatprep.subr.mxu0 0.0
    %188 = vmatpush1.msra.mxu0 0.0
    %189 = vmatprep.subr.mxu0 0.0
    %190 = vmatpush1.msra.mxu0 0.0
    %191 = vmatprep.subr.mxu0 0.0
    %192 = vmatpush1.msra.mxu0 0.0
    %193 = vmatprep.subr.mxu0 0.0
    %194 = vmatpush1.msra.mxu0 0.0
    %195 = vmatprep.subr.mxu0 0.0
    %196 = vmatpush1.msra.mxu0 0.0
    %197 = vmatprep.subr.mxu0 0.0
    %198 = vmatpush1.msra.mxu0 0.0
    %199 = vmatprep.subr.mxu0 0.0
    %200 = vmatpush1.msra.mxu0 0.0
    %201 = vmatprep.subr.mxu0 0.0
    %202 = vmatpush1.msra.mxu0 0.0
    %203 = vmatprep.subr.mxu0 0.0
    %204 = vmatpush1.msra.mxu0 0.0
    %205 = vmatprep.subr.mxu0 0.0
    %206 = vmatpush1.msra.mxu0 0.0
    %207 = vmatprep.subr.mxu0 0.0
    %208 = vmatpush1.msra.mxu0 0.0
    %209 = vmatprep.subr.mxu0 0.0
    %210 = vmatpush1.msra.mxu0 0.0
    %211 = vmatprep.mubr.f32.mxu0 0.0
    %212 = vmatmul.mubr.f32.gmra.mrb[0].mxu0 %v61
    %v213 = vpop.f32.mrb[0].mxu0
    %v214 = vadd.f32 0.0, %v213
    %v215 = vpop.f32.mrb[0].mxu0
    %v216 = vadd.f32 0.0, %v215
    %217 = vdwg.mxu0
    %v218 = vmul.f32 %v143, 0.01
    %v219 = vmul.f32 %v145, 0.01
    %v220 = vmul.f32 %v214, 0.01
    %v221 = vmul.f32 %v216, 0.01
    %v222 = vmax.f32 %v143, %v218
    %v223 = vmax.f32 %v145, %v219
    %v224 = vmax.f32 %v214, %v220
    %v225 = vmax.f32 %v216, %v221
    %226 = vst [vmem:[#allocation7] sm:$0xff] %v222
    %227 = vst [vmem:[#allocation7 + $0x8] sm:$0xff] %v223
    %228 = vst [vmem:[#allocation7 + $0x10] sm:$0xff] %v224
    %229 = vst [vmem:[#allocation7 + $0x18] sm:$0xff] %v225
    // Predicated region
    $region18: #{tpu_custom_call.1} parent=1 // pred_check
      _
    $region19: #{tpu_custom_call.1} parent=1 // pred_check_branch
      %231 = sbr.rel (0) target = $region21
    $region20: #{tpu_custom_call.1} parent=1 // pred_region
      %s233 = ssub.s32 512, 512
      %234 = vsyncadd [#allocation4], %s233
      %s236 = sshll.u32 [#allocation7], 4
      %s237 = int_to_ptr.vmem [resolvable:$true] %s236
      %239 = dma.vmem_to_hbm [thread:$0]  %s237, 512, %s2, [#allocation4]
    $region21: #{tpu_custom_call.1} parent=1 // pred_fallthru
      _
    // Predicated region
    $region22: #{tpu_custom_call.1} parent=1 // pred_check
      _
    $region23: #{tpu_custom_call.1} parent=1 // pred_check_branch
      %241 = sbr.rel (0) target = $region25
    $region24: #{tpu_custom_call.1} parent=1 // pred_region
      %242 = dma.done [#allocation4], 512
    $region25: #{tpu_custom_call.1} parent=1 // pred_fallthru
      _
    %243 = vsyncpa [#allocation3], 1
    %244 = vsyncpa [#allocation6], 1
    %245 = vsyncpa [#allocation4], 1

</llo_original>
